<compile_context>
chip_gen: v7x
topology: tpu7x:2x2x1
jax: 0.10.0
libtpu: 0.0.40
codegen_flags: <defaults>
</compile_context>

<pallas_src>
import functools

import jax
import jax.numpy as jnp
from jax.experimental import pallas as pl
from jax.experimental.pallas import tpu as pltpu


def _round_up(v, m):
    return ((v + m - 1) // m) * m


def _attention_output_kernel(x_ref, w1_ref, b1_ref, w2_ref, b2_ref,
                             gamma_ref, beta_ref, o_ref, *, eps, inv_d):
    # One tile of rows, full feature dim. FFN + residual + LayerNorm fused.
    x = x_ref[...]                                    # (TM, D), input dtype
    x_f32 = x.astype(jnp.float32)

    # expand + ReLU  (bf16 x bf16 -> f32 accumulation on the MXU)
    h = jnp.dot(x.astype(w1_ref.dtype), w1_ref[...],
                preferred_element_type=jnp.float32)
    h = jnp.maximum(h + b1_ref[...].astype(jnp.float32), 0.0)

    # squeeze
    y = jnp.dot(h.astype(w2_ref.dtype), w2_ref[...],
                preferred_element_type=jnp.float32)
    y = y + b2_ref[...].astype(jnp.float32)

    # dropout=None in the reference module -> identity (no RNG path needed).

    # residual + LayerNorm over the last dim, all in f32 (v5e has no bf16 VPU).
    y = y + x_f32
    mean = jnp.sum(y, axis=-1, keepdims=True) * inv_d
    centered = y - mean
    var = jnp.sum(centered * centered, axis=-1, keepdims=True) * inv_d
    out = centered * jax.lax.rsqrt(var + eps)
    out = out * gamma_ref[...].astype(jnp.float32) + beta_ref[...].astype(jnp.float32)
    o_ref[...] = out.astype(o_ref.dtype)


def attention_output(x, w1, b1, w2, b2, gamma, beta, *,
                     eps=1e-5, tile_m=256, mxu_dtype=jnp.bfloat16):
    """x: [B, N, D]; w1: [D, 2D]; b1: [2D]; w2: [2D, D]; b2/gamma/beta: [D].

    D should be a multiple of 128 (lane-dense) for best performance; it is the
    model width so this holds for real GeoTransformer configs (e.g. 256).
    """
    B, N, D = x.shape
    D2 = w1.shape[1]
    M = B * N

    # Row tile: multiple of 8 (sublanes), but never bigger than the padded M so
    # tiny inputs don't pay for a 256-row tile of padding.
    tile_m = max(8, min(_round_up(tile_m, 8), _round_up(M, 8)))
    M_pad = _round_up(M, tile_m)

    x2d = x.reshape(M, D)
    if M_pad != M:
        x2d = jnp.pad(x2d, ((0, M_pad - M), (0, 0)))

    # bf16 weights: native high-throughput MXU path and half the resident
    # weight VMEM footprint. Biases / LN params stay f32 (epilogue precision).
    w1_mx = w1.astype(mxu_dtype)
    w2_mx = w2.astype(mxu_dtype)
    b1_2d = b1.reshape(1, D2).astype(jnp.float32)
    b2_2d = b2.reshape(1, D).astype(jnp.float32)
    gamma_2d = gamma.reshape(1, D).astype(jnp.float32)
    beta_2d = beta.reshape(1, D).astype(jnp.float32)

    grid = (M_pad // tile_m,)

    # Explicit VMEM budget: double-buffered x/out tiles + (double-buffered)
    # resident weights + f32 intermediates; clamp to 64 MiB (v7x physical VMEM).
    w_bytes = (D * D2 + D2 * D) * jnp.dtype(mxu_dtype).itemsize
    tile_bytes = tile_m * 2 * D * x.dtype.itemsize * 2      # x + out, 2-deep
    act_bytes = tile_m * (D2 + 2 * D) * 4                   # h, y intermediates
    vmem_limit = int(min(64 * 1024 * 1024,
                         max(32 * 1024 * 1024,
                             2 * (2 * w_bytes + tile_bytes + act_bytes))))

    cost = pl.CostEstimate(
        flops=4 * M_pad * D * D2 + 10 * M_pad * D,           # 2 matmuls + epilogue
        transcendentals=M_pad,                               # rsqrt per row
        bytes_accessed=2 * M_pad * D * x.dtype.itemsize + 2 * w_bytes,
    )

    # NOTE: constant index_maps keep the weights resident (fetched once);
    # pipeline_mode=pl.Buffered(1) would also halve their VMEM allocation, but
    # default double-buffering comfortably fits the budget computed above.
    out2d = pl.pallas_call(
        functools.partial(_attention_output_kernel, eps=eps, inv_d=1.0 / D),
        out_shape=jax.ShapeDtypeStruct((M_pad, D), x.dtype),
        grid_spec=pltpu.PrefetchScalarGridSpec(
            num_scalar_prefetch=0,
            grid=grid,
            in_specs=[
                pl.BlockSpec((tile_m, D), lambda i: (i, 0)),   # x rows (streamed)
                pl.BlockSpec((D, D2), lambda i: (0, 0)),       # W1 (resident)
                pl.BlockSpec((1, D2), lambda i: (0, 0)),       # b1
                pl.BlockSpec((D2, D), lambda i: (0, 0)),       # W2 (resident)
                pl.BlockSpec((1, D), lambda i: (0, 0)),        # b2
                pl.BlockSpec((1, D), lambda i: (0, 0)),        # gamma
                pl.BlockSpec((1, D), lambda i: (0, 0)),        # beta
            ],
            out_specs=pl.BlockSpec((tile_m, D), lambda i: (i, 0)),
        ),
        compiler_params=pltpu.CompilerParams(
            dimension_semantics=("parallel",),
            vmem_limit_bytes=vmem_limit),
        cost_estimate=cost,
    )(x2d, w1_mx, b1_2d, w2_mx, b2_2d, gamma_2d, beta_2d)

    if M_pad != M:
        out2d = out2d[:M]
    return out2d.reshape(B, N, D)


def _reference(x, w1, b1, w2, b2, gamma, beta, eps=1e-5):
    h = jnp.maximum(x @ w1 + b1, 0.0)
    h = h @ w2 + b2
    y = x + h
    mean = jnp.mean(y, axis=-1, keepdims=True)
    var = jnp.mean((y - mean) ** 2, axis=-1, keepdims=True)
    return (y - mean) * jax.lax.rsqrt(var + eps) * gamma + beta


if __name__ == "__main__":
    key = jax.random.PRNGKey(0)
    # d_model = 256 (GeoTransformer default, lane-dense); N=13 exercises the
    # row-padding / remainder path.
    B, N, D = 2, 13, 256
    D2 = 2 * D

    kx, k1, k2, k3, k4, k5, k6 = jax.random.split(key, 7)

    x = jax.random.normal(kx, (B, N, D), dtype=jnp.float32)

    # Deterministic params mimicking nn.Linear defaults (uniform +/- 1/sqrt(fan_in)).
    lim1 = 1.0 / jnp.sqrt(jnp.float32(D))
    w1 = jax.random.uniform(k1, (D, D2), jnp.float32, -lim1, lim1)
    b1 = jax.random.uniform(k2, (D2,), jnp.float32, -lim1, lim1)
    lim2 = 1.0 / jnp.sqrt(jnp.float32(D2))
    w2 = jax.random.uniform(k3, (D2, D), jnp.float32, -lim2, lim2)
    b2 = jax.random.uniform(k4, (D,), jnp.float32, -lim2, lim2)
    gamma = 1.0 + 0.1 * jax.random.normal(k5, (D,), dtype=jnp.float32)
    beta = 0.1 * jax.random.normal(k6, (D,), dtype=jnp.float32)

    out = attention_output(x, w1, b1, w2, b2, gamma, beta)
    out = jax.block_until_ready(out)

    ref = _reference(x, w1, b1, w2, b2, gamma, beta)
    assert out.shape == (B, N, D)
    # Looser tolerance than the pure-f32 version: matmul operands are bf16
    # (f32 accumulation + f32 LayerNorm epilogue are preserved).
    assert jnp.allclose(out, ref, atol=3e-2, rtol=3e-2), \
        f"mismatch vs reference, max abs err = {float(jnp.max(jnp.abs(out - ref)))}"

    print("KERNEL_OK")
</pallas_src>

<mosaic_0001>
module attributes {stable_mosaic.version = 11 : i64} {
  func.func @_attention_output_kernel(%arg0: i32, %arg1: memref<32x256xf32, #tpu.memory_space<vmem>>, %arg2: memref<256x512xbf16, #tpu.memory_space<vmem>>, %arg3: memref<1x512xf32, #tpu.memory_space<vmem>>, %arg4: memref<512x256xbf16, #tpu.memory_space<vmem>>, %arg5: memref<1x256xf32, #tpu.memory_space<vmem>>, %arg6: memref<1x256xf32, #tpu.memory_space<vmem>>, %arg7: memref<1x256xf32, #tpu.memory_space<vmem>>, %arg8: memref<32x256xf32, #tpu.memory_space<vmem>>) attributes {dimension_semantics = [#tpu.dimension_semantics<parallel>], iteration_bounds = array<i64: 1>, scalar_prefetch = 0 : i64, scratch_operands = 0 : i64, tpu.core_type = #tpu.core_type<tc>, window_params = [{transform_indices = @transform_0, window_bounds = array<i64: 32, 256>}, {pipeline_mode = #tpu.pipeline_mode<synchronous>, transform_indices = @transform_1, window_bounds = array<i64: 256, 512>}, {pipeline_mode = #tpu.pipeline_mode<synchronous>, transform_indices = @transform_2, window_bounds = array<i64: 1, 512>}, {pipeline_mode = #tpu.pipeline_mode<synchronous>, transform_indices = @transform_3, window_bounds = array<i64: 512, 256>}, {pipeline_mode = #tpu.pipeline_mode<synchronous>, transform_indices = @transform_4, window_bounds = array<i64: 1, 256>}, {pipeline_mode = #tpu.pipeline_mode<synchronous>, transform_indices = @transform_5, window_bounds = array<i64: 1, 256>}, {pipeline_mode = #tpu.pipeline_mode<synchronous>, transform_indices = @transform_6, window_bounds = array<i64: 1, 256>}, {transform_indices = @transform_7, window_bounds = array<i64: 32, 256>}]} {
    %c0 = arith.constant 0 : index
    %c0_0 = arith.constant 0 : index
    %0 = vector.load %arg1[%c0, %c0_0] : memref<32x256xf32, #tpu.memory_space<vmem>>, vector<32x256xf32>
    %1 = arith.truncf %0 : vector<32x256xf32> to vector<32x256xbf16>
    %c0_1 = arith.constant 0 : index
    %c0_2 = arith.constant 0 : index
    %2 = vector.load %arg2[%c0_1, %c0_2] : memref<256x512xbf16, #tpu.memory_space<vmem>>, vector<256x512xbf16>
    %cst = arith.constant dense<0.000000e+00> : vector<32x512xf32>
    %3 = tpu.matmul %1, %2, %cst {dimension_numbers = #tpu.dot_dimension_numbers<[1], [0], [0], [1], [0, 0, 1, 1], [], []>} : vector<32x256xbf16>, vector<256x512xbf16>, vector<32x512xf32> -> vector<32x512xf32>
    %c0_3 = arith.constant 0 : index
    %c0_4 = arith.constant 0 : index
    %4 = vector.load %arg3[%c0_3, %c0_4] : memref<1x512xf32, #tpu.memory_space<vmem>>, vector<1x512xf32>
    %5 = vector.broadcast %4 : vector<1x512xf32> to vector<32x512xf32>
    %6 = arith.addf %3, %5 : vector<32x512xf32>
    %cst_5 = arith.constant 0.000000e+00 : f32
    %7 = vector.broadcast %cst_5 : f32 to vector<32x512xf32>
    %8 = arith.maximumf %6, %7 : vector<32x512xf32>
    %9 = arith.truncf %8 : vector<32x512xf32> to vector<32x512xbf16>
    %c0_6 = arith.constant 0 : index
    %c0_7 = arith.constant 0 : index
    %10 = vector.load %arg4[%c0_6, %c0_7] : memref<512x256xbf16, #tpu.memory_space<vmem>>, vector<512x256xbf16>
    %cst_8 = arith.constant dense<0.000000e+00> : vector<32x256xf32>
    %11 = tpu.matmul %9, %10, %cst_8 {dimension_numbers = #tpu.dot_dimension_numbers<[1], [0], [0], [1], [0, 0, 1, 1], [], []>} : vector<32x512xbf16>, vector<512x256xbf16>, vector<32x256xf32> -> vector<32x256xf32>
    %c0_9 = arith.constant 0 : index
    %c0_10 = arith.constant 0 : index
    %12 = vector.load %arg5[%c0_9, %c0_10] : memref<1x256xf32, #tpu.memory_space<vmem>>, vector<1x256xf32>
    %13 = vector.broadcast %12 : vector<1x256xf32> to vector<32x256xf32>
    %14 = arith.addf %11, %13 : vector<32x256xf32>
    %15 = arith.addf %14, %0 : vector<32x256xf32>
    %cst_11 = arith.constant dense<0.000000e+00> : vector<32xf32>
    %16 = vector.multi_reduction <add>, %15, %cst_11 [1] : vector<32x256xf32> to vector<32xf32>
    %17 = vector.shape_cast %16 : vector<32xf32> to vector<32x1xf32>
    %cst_12 = arith.constant 3.906250e-03 : f32
    %18 = vector.broadcast %cst_12 : f32 to vector<32x1xf32>
    %19 = arith.mulf %17, %18 : vector<32x1xf32>
    %20 = vector.broadcast %19 : vector<32x1xf32> to vector<32x256xf32>
    %21 = arith.subf %15, %20 : vector<32x256xf32>
    %22 = arith.mulf %21, %21 : vector<32x256xf32>
    %cst_13 = arith.constant dense<0.000000e+00> : vector<32xf32>
    %23 = vector.multi_reduction <add>, %22, %cst_13 [1] : vector<32x256xf32> to vector<32xf32>
    %24 = vector.shape_cast %23 : vector<32xf32> to vector<32x1xf32>
    %cst_14 = arith.constant 3.906250e-03 : f32
    %25 = vector.broadcast %cst_14 : f32 to vector<32x1xf32>
    %26 = arith.mulf %24, %25 : vector<32x1xf32>
    %cst_15 = arith.constant 9.99999974E-6 : f32
    %27 = vector.broadcast %cst_15 : f32 to vector<32x1xf32>
    %28 = arith.addf %26, %27 : vector<32x1xf32>
    %29 = math.rsqrt %28 : vector<32x1xf32>
    %30 = vector.broadcast %29 : vector<32x1xf32> to vector<32x256xf32>
    %31 = arith.mulf %21, %30 : vector<32x256xf32>
    %c0_16 = arith.constant 0 : index
    %c0_17 = arith.constant 0 : index
    %32 = vector.load %arg6[%c0_16, %c0_17] : memref<1x256xf32, #tpu.memory_space<vmem>>, vector<1x256xf32>
    %33 = vector.broadcast %32 : vector<1x256xf32> to vector<32x256xf32>
    %34 = arith.mulf %31, %33 : vector<32x256xf32>
    %c0_18 = arith.constant 0 : index
    %c0_19 = arith.constant 0 : index
    %35 = vector.load %arg7[%c0_18, %c0_19] : memref<1x256xf32, #tpu.memory_space<vmem>>, vector<1x256xf32>
    %36 = vector.broadcast %35 : vector<1x256xf32> to vector<32x256xf32>
    %37 = arith.addf %34, %36 : vector<32x256xf32>
    %c0_20 = arith.constant 0 : index
    %c0_21 = arith.constant 0 : index
    %38 = vector.load %arg8[%c0_20, %c0_21] : memref<32x256xf32, #tpu.memory_space<vmem>>, vector<32x256xf32>
    tpu.vector_store %arg8[%c0_20, %c0_21], %37 {strides = array<i32>} : memref<32x256xf32, #tpu.memory_space<vmem>>, vector<32x256xf32>,
    return
  }
  func.func @transform_0(%arg0: i32) -> (i32, i32) {
    %c0_i32 = arith.constant 0 : i32
    %c0_i32_0 = arith.constant 0 : i32
    return %arg0, %c0_i32 : i32, i32
  }
  func.func @transform_1(%arg0: i32) -> (i32, i32) {
    %c0_i32 = arith.constant 0 : i32
    %c0_i32_0 = arith.constant 0 : i32
    %c0_i32_1 = arith.constant 0 : i32
    return %c0_i32, %c0_i32_0 : i32, i32
  }
  func.func @transform_2(%arg0: i32) -> (i32, i32) {
    %c0_i32 = arith.constant 0 : i32
    %c0_i32_0 = arith.constant 0 : i32
    %c0_i32_1 = arith.constant 0 : i32
    return %c0_i32, %c0_i32_0 : i32, i32
  }
  func.func @transform_3(%arg0: i32) -> (i32, i32) {
    %c0_i32 = arith.constant 0 : i32
    %c0_i32_0 = arith.constant 0 : i32
    %c0_i32_1 = arith.constant 0 : i32
    return %c0_i32, %c0_i32_0 : i32, i32
  }
  func.func @transform_4(%arg0: i32) -> (i32, i32) {
    %c0_i32 = arith.constant 0 : i32
    %c0_i32_0 = arith.constant 0 : i32
    %c0_i32_1 = arith.constant 0 : i32
    return %c0_i32, %c0_i32_0 : i32, i32
  }
  func.func @transform_5(%arg0: i32) -> (i32, i32) {
    %c0_i32 = arith.constant 0 : i32
    %c0_i32_0 = arith.constant 0 : i32
    %c0_i32_1 = arith.constant 0 : i32
    return %c0_i32, %c0_i32_0 : i32, i32
  }
  func.func @transform_6(%arg0: i32) -> (i32, i32) {
    %c0_i32 = arith.constant 0 : i32
    %c0_i32_0 = arith.constant 0 : i32
    %c0_i32_1 = arith.constant 0 : i32
    return %c0_i32, %c0_i32_0 : i32, i32
  }
  func.func @transform_7(%arg0: i32) -> (i32, i32) {
    %c0_i32 = arith.constant 0 : i32
    %c0_i32_0 = arith.constant 0 : i32
    return %arg0, %c0_i32 : i32, i32
  }
}

</mosaic_0001>

<llo_original>
// kernel: tpu_custom_call.1
$region0: #{tpu_custom_call.1}
  #allocation0 [shape = 'u32[]', space=smem, size = 0x4, offset = 0x4, fixed_abs, tag = 'smem constant byte address 0x4 - core index']
  #allocation1 [shape = 'u32[144,128]{1,0:T(1,128)}', space=vmem, size = 0x12000, scoped, tag = 'internal scratch']
  %s0 = inlined_call_operand.hbm [shape: f32[32,256], index: 0, kind: input, shape index: {}]
  %s1 = inlined_call_operand.hbm [shape: bf16[256,512], index: 1, kind: input, shape index: {}]
  %s2 = inlined_call_operand.vmem [shape: f32[1,512], index: 2, kind: input, shape index: {}]
  %s3 = inlined_call_operand.hbm [shape: bf16[512,256], index: 3, kind: input, shape index: {}]
  %s4 = inlined_call_operand.vmem [shape: f32[1,256], index: 4, kind: input, shape index: {}]
  %s5 = inlined_call_operand.vmem [shape: f32[1,256], index: 5, kind: input, shape index: {}]
  %s6 = inlined_call_operand.vmem [shape: f32[1,256], index: 6, kind: input, shape index: {}]
  %s7 = inlined_call_operand.hbm [shape: f32[32,256], index: 7, kind: output, shape index: {}]
  %s8 = sld [smem:[#allocation0]]
  $region50: #{tpu_custom_call.1} parent=0
    _
  %s10 = ssub.s32 1, %s8
  %s11 = scalar_select 0, %s10, %s8
  $region1: #{tpu_custom_call.1} parent=0
    #allocation2 [shape = 'u8[32768]{0}', space=vmem, size = 0x8000, scoped, tag = 'input window, operand 0, single buffered']
    #allocation3 [shape = 's32[1]{0}', space=sflag, size = 0x4, scoped, tag = 'scoped memory for tpu_custom_call.1']
    #allocation4 [shape = 's32[1]{0}', space=sflag, size = 0x4, scoped, tag = 'scoped memory for tpu_custom_call.1']
    #allocation5 [shape = 'u8[262144]{0}', space=vmem, size = 0x40000, scoped, tag = 'input window, operand 1, single buffered']
    #allocation6 [shape = 's32[1]{0}', space=sflag, size = 0x4, scoped, tag = 'scoped memory for tpu_custom_call.1']
    #allocation7 [shape = 'u8[262144]{0}', space=vmem, size = 0x40000, scoped, tag = 'input window, operand 3, single buffered']
    #allocation8 [shape = 'u8[32768]{0}', space=vmem, size = 0x8000, scoped, tag = 'output window, operand 0, single buffered']
    %12 = vsyncpa [#allocation3], 0
    %13 = vsyncpa [#allocation6], 0
    %14 = vsyncpa [#allocation4], 0
    // Predicated region
    $region2: #{tpu_custom_call.1} parent=1 // pred_check
      _
    $region3: #{tpu_custom_call.1} parent=1 // pred_check_branch
      %16 = sbr.rel (0) target = $region5
    $region4: #{tpu_custom_call.1} parent=1 // pred_region
      %s18 = ssub.s32 1024, 1024
      %19 = vsyncadd [#allocation3], %s18
      %s20 = sshll.u32 [#allocation2], 4
      %s21 = int_to_ptr.vmem [resolvable:$true] %s20
      %26 = dma.hbm_to_vmem [thread:$0]  %s0, 1024, %s21, [#allocation3], 256, 256, 16
    $region5: #{tpu_custom_call.1} parent=1 // pred_fallthru
      _
    // Predicated region
    $region6: #{tpu_custom_call.1} parent=1 // pred_check
      _
    $region7: #{tpu_custom_call.1} parent=1 // pred_check_branch
      %28 = sbr.rel (0) target = $region9
    $region8: #{tpu_custom_call.1} parent=1 // pred_region
      %s30 = ssub.s32 8192, 8192
      %31 = vsyncadd [#allocation6], %s30
      %s32 = sshll.u32 [#allocation5], 4
      %s33 = int_to_ptr.vmem [resolvable:$true] %s32
      %38 = dma.hbm_to_vmem [thread:$0]  %s1, 8192, %s33, [#allocation6], 256, 256, 16
    $region9: #{tpu_custom_call.1} parent=1 // pred_fallthru
      _
    // Predicated region
    $region10: #{tpu_custom_call.1} parent=1 // pred_check
      _
    $region11: #{tpu_custom_call.1} parent=1 // pred_check_branch
      %40 = sbr.rel (0) target = $region13
    $region12: #{tpu_custom_call.1} parent=1 // pred_region
      _
    $region13: #{tpu_custom_call.1} parent=1 // pred_fallthru
      _
    // Predicated region
    $region14: #{tpu_custom_call.1} parent=1 // pred_check
      _
    $region15: #{tpu_custom_call.1} parent=1 // pred_check_branch
      %42 = sbr.rel (0) target = $region17
    $region16: #{tpu_custom_call.1} parent=1 // pred_region
      %s44 = ssub.s32 8192, 8192
      %45 = vsyncadd [#allocation6], %s44
      %s46 = sshll.u32 [#allocation7], 4
      %s47 = int_to_ptr.vmem [resolvable:$true] %s46
      %52 = dma.hbm_to_vmem [thread:$0]  %s3, 8192, %s47, [#allocation6], 128, 128, 8
    $region17: #{tpu_custom_call.1} parent=1 // pred_fallthru
      _
    // Predicated region
    $region18: #{tpu_custom_call.1} parent=1 // pred_check
      _
    $region19: #{tpu_custom_call.1} parent=1 // pred_check_branch
      %54 = sbr.rel (0) target = $region21
    $region20: #{tpu_custom_call.1} parent=1 // pred_region
      _
    $region21: #{tpu_custom_call.1} parent=1 // pred_fallthru
      _
    // Predicated region
    $region22: #{tpu_custom_call.1} parent=1 // pred_check
      _
    $region23: #{tpu_custom_call.1} parent=1 // pred_check_branch
      %56 = sbr.rel (0) target = $region25
    $region24: #{tpu_custom_call.1} parent=1 // pred_region
      _
    $region25: #{tpu_custom_call.1} parent=1 // pred_fallthru
      _
    // Predicated region
    $region26: #{tpu_custom_call.1} parent=1 // pred_check
      _
    $region27: #{tpu_custom_call.1} parent=1 // pred_check_branch
      %58 = sbr.rel (0) target = $region29
    $region28: #{tpu_custom_call.1} parent=1 // pred_region
      _
    $region29: #{tpu_custom_call.1} parent=1 // pred_fallthru
      _
    // Predicated region
    $region30: #{tpu_custom_call.1} parent=1 // pred_check
      _
    $region31: #{tpu_custom_call.1} parent=1 // pred_check_branch
      %60 = sbr.rel (0) target = $region33
    $region32: #{tpu_custom_call.1} parent=1 // pred_region
      %61 = dma.done [#allocation3], 1024
    $region33: #{tpu_custom_call.1} parent=1 // pred_fallthru
      _
    // Predicated region
    $region34: #{tpu_custom_call.1} parent=1 // pred_check
      _
    $region35: #{tpu_custom_call.1} parent=1 // pred_check_branch
      %63 = sbr.rel (0) target = $region37
    $region36: #{tpu_custom_call.1} parent=1 // pred_region
      %64 = dma.done [#allocation6], 8192
    $region37: #{tpu_custom_call.1} parent=1 // pred_fallthru
      _
    // Predicated region
    $region38: #{tpu_custom_call.1} parent=1 // pred_check
      _
    $region39: #{tpu_custom_call.1} parent=1 // pred_check_branch
      %66 = sbr.rel (0) target = $region41
    $region40: #{tpu_custom_call.1} parent=1 // pred_region
      %67 = dma.done [#allocation6], 8192
    $region41: #{tpu_custom_call.1} parent=1 // pred_fallthru
      _
    %v68 = vld [vmem:[#allocation2] sm:$0xff]
    %v69 = vld [vmem:[#allocation2 + $0x8] sm:$0xff]
    %v70 = vld [vmem:[#allocation2 + $0x10] sm:$0xff]
    %v71 = vld [vmem:[#allocation2 + $0x18] sm:$0xff]
    %v72 = vld [vmem:[#allocation2 + $0x20] sm:$0xff]
    %v73 = vld [vmem:[#allocation2 + $0x28] sm:$0xff]
    %v74 = vld [vmem:[#allocation2 + $0x30] sm:$0xff]
    %v75 = vld [vmem:[#allocation2 + $0x38] sm:$0xff]
    %v76 = vpack.c.bf16 %v70, %v68
    %v77 = vpack.c.bf16 %v71, %v69
    %v78 = vpack.c.bf16 %v74, %v72
    %v79 = vpack.c.bf16 %v75, %v73
    %v80 = vld [vmem:[#allocation5] sm:$0xff]
    %v81 = vld [vmem:[#allocation5 + $0x8] sm:$0xff]
    %v82 = vld [vmem:[#allocation5 + $0x10] sm:$0xff]
    %v83 = vld [vmem:[#allocation5 + $0x18] sm:$0xff]
    %v84 = vld [vmem:[#allocation5 + $0x20] sm:$0xff]
    %v85 = vld [vmem:[#allocation5 + $0x28] sm:$0xff]
    %v86 = vld [vmem:[#allocation5 + $0x30] sm:$0xff]
    %v87 = vld [vmem:[#allocation5 + $0x38] sm:$0xff]
    %v88 = vld [vmem:[#allocation5 + $0x40] sm:$0xff]
    %v89 = vld [vmem:[#allocation5 + $0x48] sm:$0xff]
    %v90 = vld [vmem:[#allocation5 + $0x50] sm:$0xff]
    %v91 = vld [vmem:[#allocation5 + $0x58] sm:$0xff]
    %v92 = vld [vmem:[#allocation5 + $0x60] sm:$0xff]
    %v93 = vld [vmem:[#allocation5 + $0x68] sm:$0xff]
    %v94 = vld [vmem:[#allocation5 + $0x70] sm:$0xff]
    %v95 = vld [vmem:[#allocation5 + $0x78] sm:$0xff]
    %v96 = vld [vmem:[#allocation5 + $0x80] sm:$0xff]
    %v97 = vld [vmem:[#allocation5 + $0x88] sm:$0xff]
    %v98 = vld [vmem:[#allocation5 + $0x90] sm:$0xff]
    %v99 = vld [vmem:[#allocation5 + $0x98] sm:$0xff]
    %v100 = vld [vmem:[#allocation5 + $0xa0] sm:$0xff]
    %v101 = vld [vmem:[#allocation5 + $0xa8] sm:$0xff]
    %v102 = vld [vmem:[#allocation5 + $0xb0] sm:$0xff]
    %v103 = vld [vmem:[#allocation5 + $0xb8] sm:$0xff]
    %v104 = vld [vmem:[#allocation5 + $0xc0] sm:$0xff]
    %v105 = vld [vmem:[#allocation5 + $0xc8] sm:$0xff]
    %v106 = vld [vmem:[#allocation5 + $0xd0] sm:$0xff]
    %v107 = vld [vmem:[#allocation5 + $0xd8] sm:$0xff]
    %v108 = vld [vmem:[#allocation5 + $0xe0] sm:$0xff]
    %v109 = vld [vmem:[#allocation5 + $0xe8] sm:$0xff]
    %v110 = vld [vmem:[#allocation5 + $0xf0] sm:$0xff]
    %v111 = vld [vmem:[#allocation5 + $0xf8] sm:$0xff]
    %v112 = vld [vmem:[#allocation5 + $0x100] sm:$0xff]
    %v113 = vld [vmem:[#allocation5 + $0x108] sm:$0xff]
    %v114 = vld [vmem:[#allocation5 + $0x110] sm:$0xff]
    %v115 = vld [vmem:[#allocation5 + $0x118] sm:$0xff]
    %v116 = vld [vmem:[#allocation5 + $0x120] sm:$0xff]
    %v117 = vld [vmem:[#allocation5 + $0x128] sm:$0xff]
    %v118 = vld [vmem:[#allocation5 + $0x130] sm:$0xff]
    %v119 = vld [vmem:[#allocation5 + $0x138] sm:$0xff]
    %v120 = vld [vmem:[#allocation5 + $0x140] sm:$0xff]
    %v121 = vld [vmem:[#allocation5 + $0x148] sm:$0xff]
    %v122 = vld [vmem:[#allocation5 + $0x150] sm:$0xff]
    %v123 = vld [vmem:[#allocation5 + $0x158] sm:$0xff]
    %v124 = vld [vmem:[#allocation5 + $0x160] sm:$0xff]
    %v125 = vld [vmem:[#allocation5 + $0x168] sm:$0xff]
    %v126 = vld [vmem:[#allocation5 + $0x170] sm:$0xff]
    %v127 = vld [vmem:[#allocation5 + $0x178] sm:$0xff]
    %v128 = vld [vmem:[#allocation5 + $0x180] sm:$0xff]
    %v129 = vld [vmem:[#allocation5 + $0x188] sm:$0xff]
    %v130 = vld [vmem:[#allocation5 + $0x190] sm:$0xff]
    %v131 = vld [vmem:[#allocation5 + $0x198] sm:$0xff]
    %v132 = vld [vmem:[#allocation5 + $0x1a0] sm:$0xff]
    %v133 = vld [vmem:[#allocation5 + $0x1a8] sm:$0xff]
    %v134 = vld [vmem:[#allocation5 + $0x1b0] sm:$0xff]
    %v135 = vld [vmem:[#allocation5 + $0x1b8] sm:$0xff]
    %v136 = vld [vmem:[#allocation5 + $0x1c0] sm:$0xff]
    %v137 = vld [vmem:[#allocation5 + $0x1c8] sm:$0xff]
    %v138 = vld [vmem:[#allocation5 + $0x1d0] sm:$0xff]
    %v139 = vld [vmem:[#allocation5 + $0x1d8] sm:$0xff]
    %v140 = vld [vmem:[#allocation5 + $0x1e0] sm:$0xff]
    %v141 = vld [vmem:[#allocation5 + $0x1e8] sm:$0xff]
    %v142 = vld [vmem:[#allocation5 + $0x1f0] sm:$0xff]
    %v143 = vld [vmem:[#allocation5 + $0x1f8] sm:$0xff]
    %v144 = vld [vmem:[%s2] sm:$0xf]
    %v146 = vlaneseq
    %v147 = vshrl.u32 %v146, 7
    %v148 = vsub.s32 0, %v147
    %v149 = vrot.slane %v144, %v148
    %v150 = vlaneseq
    %v151 = vshrl.u32 %v150, 7
    %v152 = vsub.s32 1, %v151
    %v153 = vrot.slane %v144, %v152
    %v154 = vlaneseq
    %v155 = vshrl.u32 %v154, 7
    %v156 = vsub.s32 2, %v155
    %v157 = vrot.slane %v144, %v156
    %v158 = vlaneseq
    %v159 = vshrl.u32 %v158, 7
    %v160 = vsub.s32 3, %v159
    %v161 = vrot.slane %v144, %v160
    %v230 = vunpack.c.l.b16 %v80
    %v231 = vunpack.c.h.b16 %v80
    %v232 = vunpack.c.l.b16 %v81
    %v233 = vunpack.c.h.b16 %v81
    %v234 = vunpack.c.l.b16 %v82
    %v235 = vunpack.c.h.b16 %v82
    %v236 = vunpack.c.l.b16 %v83
    %v237 = vunpack.c.h.b16 %v83
    %v238 = vunpack.c.l.b16 %v84
    %v239 = vunpack.c.h.b16 %v84
    %v240 = vunpack.c.l.b16 %v85
    %v241 = vunpack.c.h.b16 %v85
    %v242 = vunpack.c.l.b16 %v86
    %v243 = vunpack.c.h.b16 %v86
    %v244 = vunpack.c.l.b16 %v87
    %v245 = vunpack.c.h.b16 %v87
    %v246 = vunpack.c.l.b16 %v88
    %v247 = vunpack.c.h.b16 %v88
    %v248 = vunpack.c.l.b16 %v89
    %v249 = vunpack.c.h.b16 %v89
    %v250 = vunpack.c.l.b16 %v90
    %v251 = vunpack.c.h.b16 %v90
    %v252 = vunpack.c.l.b16 %v91
    %v253 = vunpack.c.h.b16 %v91
    %v254 = vunpack.c.l.b16 %v92
    %v255 = vunpack.c.h.b16 %v92
    %v256 = vunpack.c.l.b16 %v93
    %v257 = vunpack.c.h.b16 %v93
    %v258 = vunpack.c.l.b16 %v94
    %v259 = vunpack.c.h.b16 %v94
    %v260 = vunpack.c.l.b16 %v95
    %v261 = vunpack.c.h.b16 %v95
    %v262 = vunpack.c.l.b16 %v96
    %v263 = vunpack.c.h.b16 %v96
    %v264 = vunpack.c.l.b16 %v97
    %v265 = vunpack.c.h.b16 %v97
    %v266 = vunpack.c.l.b16 %v98
    %v267 = vunpack.c.h.b16 %v98
    %v268 = vunpack.c.l.b16 %v99
    %v269 = vunpack.c.h.b16 %v99
    %v270 = vunpack.c.l.b16 %v100
    %v271 = vunpack.c.h.b16 %v100
    %v272 = vunpack.c.l.b16 %v101
    %v273 = vunpack.c.h.b16 %v101
    %v274 = vunpack.c.l.b16 %v102
    %v275 = vunpack.c.h.b16 %v102
    %v276 = vunpack.c.l.b16 %v103
    %v277 = vunpack.c.h.b16 %v103
    %v278 = vunpack.c.l.b16 %v104
    %v279 = vunpack.c.h.b16 %v104
    %v280 = vunpack.c.l.b16 %v105
    %v281 = vunpack.c.h.b16 %v105
    %v282 = vunpack.c.l.b16 %v106
    %v283 = vunpack.c.h.b16 %v106
    %v284 = vunpack.c.l.b16 %v107
    %v285 = vunpack.c.h.b16 %v107
    %v286 = vunpack.c.l.b16 %v108
    %v287 = vunpack.c.h.b16 %v108
    %v288 = vunpack.c.l.b16 %v109
    %v289 = vunpack.c.h.b16 %v109
    %v290 = vunpack.c.l.b16 %v110
    %v291 = vunpack.c.h.b16 %v110
    %v292 = vunpack.c.l.b16 %v111
    %v293 = vunpack.c.h.b16 %v111
    %v294 = vunpack.c.l.b16 %v112
    %v295 = vunpack.c.h.b16 %v112
    %v296 = vunpack.c.l.b16 %v113
    %v297 = vunpack.c.h.b16 %v113
    %v298 = vunpack.c.l.b16 %v114
    %v299 = vunpack.c.h.b16 %v114
    %v300 = vunpack.c.l.b16 %v115
    %v301 = vunpack.c.h.b16 %v115
    %v302 = vunpack.c.l.b16 %v116
    %v303 = vunpack.c.h.b16 %v116
    %v304 = vunpack.c.l.b16 %v117
    %v305 = vunpack.c.h.b16 %v117
    %v306 = vunpack.c.l.b16 %v118
    %v307 = vunpack.c.h.b16 %v118
    %v308 = vunpack.c.l.b16 %v119
    %v309 = vunpack.c.h.b16 %v119
    %v310 = vunpack.c.l.b16 %v120
    %v311 = vunpack.c.h.b16 %v120
    %v312 = vunpack.c.l.b16 %v121
    %v313 = vunpack.c.h.b16 %v121
    %v314 = vunpack.c.l.b16 %v122
    %v315 = vunpack.c.h.b16 %v122
    %v316 = vunpack.c.l.b16 %v123
    %v317 = vunpack.c.h.b16 %v123
    %v318 = vunpack.c.l.b16 %v124
    %v319 = vunpack.c.h.b16 %v124
    %v320 = vunpack.c.l.b16 %v125
    %v321 = vunpack.c.h.b16 %v125
    %v322 = vunpack.c.l.b16 %v126
    %v323 = vunpack.c.h.b16 %v126
    %v324 = vunpack.c.l.b16 %v127
    %v325 = vunpack.c.h.b16 %v127
    %v326 = vunpack.c.l.b16 %v128
    %v327 = vunpack.c.h.b16 %v128
    %v328 = vunpack.c.l.b16 %v129
    %v329 = vunpack.c.h.b16 %v129
    %v330 = vunpack.c.l.b16 %v130
    %v331 = vunpack.c.h.b16 %v130
    %v332 = vunpack.c.l.b16 %v131
    %v333 = vunpack.c.h.b16 %v131
    %v334 = vunpack.c.l.b16 %v132
    %v335 = vunpack.c.h.b16 %v132
    %v336 = vunpack.c.l.b16 %v133
    %v337 = vunpack.c.h.b16 %v133
    %v338 = vunpack.c.l.b16 %v134
    %v339 = vunpack.c.h.b16 %v134
    %v340 = vunpack.c.l.b16 %v135
    %v341 = vunpack.c.h.b16 %v135
    %v342 = vunpack.c.l.b16 %v136
    %v343 = vunpack.c.h.b16 %v136
    %v344 = vunpack.c.l.b16 %v137
    %v345 = vunpack.c.h.b16 %v137
    %v346 = vunpack.c.l.b16 %v138
    %v347 = vunpack.c.h.b16 %v138
    %v348 = vunpack.c.l.b16 %v139
    %v349 = vunpack.c.h.b16 %v139
    %v350 = vunpack.c.l.b16 %v140
    %v351 = vunpack.c.h.b16 %v140
    %v352 = vunpack.c.l.b16 %v141
    %v353 = vunpack.c.h.b16 %v141
    %v354 = vunpack.c.l.b16 %v142
    %v355 = vunpack.c.h.b16 %v142
    %v356 = vunpack.c.l.b16 %v143
    %v357 = vunpack.c.h.b16 %v143
    %v358 = vpack.c.b16 %v234, %v230
    %v359 = vpack.c.b16 %v235, %v231
    %v360 = vpack.c.b16 %v236, %v232
    %v361 = vpack.c.b16 %v237, %v233
    %v362 = vpack.c.b16 %v242, %v238
    %v363 = vpack.c.b16 %v243, %v239
    %v364 = vpack.c.b16 %v244, %v240
    %v365 = vpack.c.b16 %v245, %v241
    %v366 = vpack.c.b16 %v250, %v246
    %v367 = vpack.c.b16 %v251, %v247
    %v368 = vpack.c.b16 %v252, %v248
    %v369 = vpack.c.b16 %v253, %v249
    %v370 = vpack.c.b16 %v258, %v254
    %v371 = vpack.c.b16 %v259, %v255
    %v372 = vpack.c.b16 %v260, %v256
    %v373 = vpack.c.b16 %v261, %v257
    %v374 = vpack.c.b16 %v266, %v262
    %v375 = vpack.c.b16 %v267, %v263
    %v376 = vpack.c.b16 %v268, %v264
    %v377 = vpack.c.b16 %v269, %v265
    %v378 = vpack.c.b16 %v274, %v270
    %v379 = vpack.c.b16 %v275, %v271
    %v380 = vpack.c.b16 %v276, %v272
    %v381 = vpack.c.b16 %v277, %v273
    %v382 = vpack.c.b16 %v282, %v278
    %v383 = vpack.c.b16 %v283, %v279
    %v384 = vpack.c.b16 %v284, %v280
    %v385 = vpack.c.b16 %v285, %v281
    %v386 = vpack.c.b16 %v290, %v286
    %v387 = vpack.c.b16 %v291, %v287
    %v388 = vpack.c.b16 %v292, %v288
    %v389 = vpack.c.b16 %v293, %v289
    %v390 = vpack.c.b16 %v298, %v294
    %v391 = vpack.c.b16 %v299, %v295
    %v392 = vpack.c.b16 %v300, %v296
    %v393 = vpack.c.b16 %v301, %v297
    %v394 = vpack.c.b16 %v306, %v302
    %v395 = vpack.c.b16 %v307, %v303
    %v396 = vpack.c.b16 %v308, %v304
    %v397 = vpack.c.b16 %v309, %v305
    %v398 = vpack.c.b16 %v314, %v310
    %v399 = vpack.c.b16 %v315, %v311
    %v400 = vpack.c.b16 %v316, %v312
    %v401 = vpack.c.b16 %v317, %v313
    %v402 = vpack.c.b16 %v322, %v318
    %v403 = vpack.c.b16 %v323, %v319
    %v404 = vpack.c.b16 %v324, %v320
    %v405 = vpack.c.b16 %v325, %v321
    %v406 = vpack.c.b16 %v330, %v326
    %v407 = vpack.c.b16 %v331, %v327
    %v408 = vpack.c.b16 %v332, %v328
    %v409 = vpack.c.b16 %v333, %v329
    %v410 = vpack.c.b16 %v338, %v334
    %v411 = vpack.c.b16 %v339, %v335
    %v412 = vpack.c.b16 %v340, %v336
    %v413 = vpack.c.b16 %v341, %v337
    %v414 = vpack.c.b16 %v346, %v342
    %v415 = vpack.c.b16 %v347, %v343
    %v416 = vpack.c.b16 %v348, %v344
    %v417 = vpack.c.b16 %v349, %v345
    %v418 = vpack.c.b16 %v354, %v350
    %v419 = vpack.c.b16 %v355, %v351
    %v420 = vpack.c.b16 %v356, %v352
    %v421 = vpack.c.b16 %v357, %v353
    %486 = vmatprep.subr.bf16.mxu0 %v359
    %487 = vmatpush1.bf16.msra.mxu0 %v358
    %488 = vmatprep.subr.bf16.mxu0 %v363
    %489 = vmatpush1.bf16.msra.mxu0 %v362
    %490 = vmatprep.subr.bf16.mxu0 %v367
    %491 = vmatpush1.bf16.msra.mxu0 %v366
    %492 = vmatprep.subr.bf16.mxu0 %v371
    %493 = vmatpush1.bf16.msra.mxu0 %v370
    %494 = vmatprep.subr.bf16.mxu0 %v375
    %495 = vmatpush1.bf16.msra.mxu0 %v374
    %496 = vmatprep.subr.bf16.mxu0 %v379
    %497 = vmatpush1.bf16.msra.mxu0 %v378
    %498 = vmatprep.subr.bf16.mxu0 %v383
    %499 = vmatpush1.bf16.msra.mxu0 %v382
    %500 = vmatprep.subr.bf16.mxu0 %v387
    %501 = vmatpush1.bf16.msra.mxu0 %v386
    %502 = vmatprep.subr.bf16.mxu0 %v391
    %503 = vmatpush1.bf16.msra.mxu0 %v390
    %504 = vmatprep.subr.bf16.mxu0 %v395
    %505 = vmatpush1.bf16.msra.mxu0 %v394
    %506 = vmatprep.subr.bf16.mxu0 %v399
    %507 = vmatpush1.bf16.msra.mxu0 %v398
    %508 = vmatprep.subr.bf16.mxu0 %v403
    %509 = vmatpush1.bf16.msra.mxu0 %v402
    %510 = vmatprep.subr.bf16.mxu0 %v407
    %511 = vmatpush1.bf16.msra.mxu0 %v406
    %512 = vmatprep.subr.bf16.mxu0 %v411
    %513 = vmatpush1.bf16.msra.mxu0 %v410
    %514 = vmatprep.subr.bf16.mxu0 %v415
    %515 = vmatpush1.bf16.msra.mxu0 %v414
    %516 = vmatprep.subr.bf16.mxu0 %v419
    %517 = vmatpush1.bf16.msra.mxu0 %v418
    %518 = vmatprep.mubr.bf16.mxu0 %v77
    %519 = vmatmul.mubr.bf16.gmra.mrb[0].mxu0 %v76
    %v520 = vpop.f32.mrb[0].mxu0
    %v521 = vadd.f32 %v149, %v520
    %v522 = vpop.f32.mrb[0].mxu0
    %v523 = vadd.f32 %v153, %v522
    %v524 = vpop.f32.mrb[0].mxu0
    %v525 = vadd.f32 %v149, %v524
    %v526 = vpop.f32.mrb[0].mxu0
    %v527 = vadd.f32 %v153, %v526
    %528 = vmatprep.mubr.bf16.mxu0 %v79
    %529 = vmatmul.mubr.bf16.gmra.mrb[0].mxu0 %v78
    %v530 = vpop.f32.mrb[0].mxu0
    %v531 = vadd.f32 %v149, %v530
    %v532 = vpop.f32.mrb[0].mxu0
    %v533 = vadd.f32 %v153, %v532
    %v534 = vpop.f32.mrb[0].mxu0
    %v535 = vadd.f32 %v149, %v534
    %v536 = vpop.f32.mrb[0].mxu0
    %v537 = vadd.f32 %v153, %v536
    %538 = vdwg.mxu0
    %539 = vmatprep.subr.bf16.mxu0 %v361
    %540 = vmatpush1.bf16.msra.mxu0 %v360
    %541 = vmatprep.subr.bf16.mxu0 %v365
    %542 = vmatpush1.bf16.msra.mxu0 %v364
    %543 = vmatprep.subr.bf16.mxu0 %v369
    %544 = vmatpush1.bf16.msra.mxu0 %v368
    %545 = vmatprep.subr.bf16.mxu0 %v373
    %546 = vmatpush1.bf16.msra.mxu0 %v372
    %547 = vmatprep.subr.bf16.mxu0 %v377
    %548 = vmatpush1.bf16.msra.mxu0 %v376
    %549 = vmatprep.subr.bf16.mxu0 %v381
    %550 = vmatpush1.bf16.msra.mxu0 %v380
    %551 = vmatprep.subr.bf16.mxu0 %v385
    %552 = vmatpush1.bf16.msra.mxu0 %v384
    %553 = vmatprep.subr.bf16.mxu0 %v389
    %554 = vmatpush1.bf16.msra.mxu0 %v388
    %555 = vmatprep.subr.bf16.mxu0 %v393
    %556 = vmatpush1.bf16.msra.mxu0 %v392
    %557 = vmatprep.subr.bf16.mxu0 %v397
    %558 = vmatpush1.bf16.msra.mxu0 %v396
    %559 = vmatprep.subr.bf16.mxu0 %v401
    %560 = vmatpush1.bf16.msra.mxu0 %v400
    %561 = vmatprep.subr.bf16.mxu0 %v405
    %562 = vmatpush1.bf16.msra.mxu0 %v404
    %563 = vmatprep.subr.bf16.mxu0 %v409
    %564 = vmatpush1.bf16.msra.mxu0 %v408
    %565 = vmatprep.subr.bf16.mxu0 %v413
    %566 = vmatpush1.bf16.msra.mxu0 %v412
    %567 = vmatprep.subr.bf16.mxu0 %v417
    %568 = vmatpush1.bf16.msra.mxu0 %v416
    %569 = vmatprep.subr.bf16.mxu0 %v421
    %570 = vmatpush1.bf16.msra.mxu0 %v420
    %571 = vmatprep.mubr.bf16.mxu0 %v77
    %572 = vmatmul.mubr.bf16.gmra.mrb[0].mxu0 %v76
    %v573 = vpop.f32.mrb[0].mxu0
    %v574 = vadd.f32 %v157, %v573
    %v575 = vpop.f32.mrb[0].mxu0
    %v576 = vadd.f32 %v161, %v575
    %v577 = vpop.f32.mrb[0].mxu0
    %v578 = vadd.f32 %v157, %v577
    %v579 = vpop.f32.mrb[0].mxu0
    %v580 = vadd.f32 %v161, %v579
    %581 = vmatprep.mubr.bf16.mxu0 %v79
    %582 = vmatmul.mubr.bf16.gmra.mrb[0].mxu0 %v78
    %v583 = vpop.f32.mrb[0].mxu0
    %v584 = vadd.f32 %v157, %v583
    %v585 = vpop.f32.mrb[0].mxu0
    %v586 = vadd.f32 %v161, %v585
    %v587 = vpop.f32.mrb[0].mxu0
    %v588 = vadd.f32 %v157, %v587
    %v589 = vpop.f32.mrb[0].mxu0
    %v590 = vadd.f32 %v161, %v589
    %591 = vdwg.mxu0
    %v592 = vmax.f32 %v521, 0.0
    %v593 = vmax.f32 %v523, 0.0
    %v594 = vmax.f32 %v574, 0.0
    %v595 = vmax.f32 %v576, 0.0
    %v596 = vmax.f32 %v525, 0.0
    %v597 = vmax.f32 %v527, 0.0
    %v598 = vmax.f32 %v578, 0.0
    %v599 = vmax.f32 %v580, 0.0
    %v600 = vmax.f32 %v531, 0.0
    %v601 = vmax.f32 %v533, 0.0
    %v602 = vmax.f32 %v584, 0.0
    %v603 = vmax.f32 %v586, 0.0
    %v604 = vmax.f32 %v535, 0.0
    %v605 = vmax.f32 %v537, 0.0
    %v606 = vmax.f32 %v588, 0.0
    %v607 = vmax.f32 %v590, 0.0
    %v608 = vpack.c.bf16 %v596, %v592
    %v609 = vpack.c.bf16 %v597, %v593
    %v610 = vpack.c.bf16 %v598, %v594
    %v611 = vpack.c.bf16 %v599, %v595
    %v612 = vpack.c.bf16 %v604, %v600
    %v613 = vpack.c.bf16 %v605, %v601
    %v614 = vpack.c.bf16 %v606, %v602
    %v615 = vpack.c.bf16 %v607, %v603
    %v616 = vld [vmem:[#allocation7] sm:$0xff]
    %v617 = vld [vmem:[#allocation7 + $0x8] sm:$0xff]
    %v618 = vld [vmem:[#allocation7 + $0x10] sm:$0xff]
    %v619 = vld [vmem:[#allocation7 + $0x18] sm:$0xff]
    %v620 = vld [vmem:[#allocation7 + $0x20] sm:$0xff]
    %v621 = vld [vmem:[#allocation7 + $0x28] sm:$0xff]
    %v622 = vld [vmem:[#allocation7 + $0x30] sm:$0xff]
    %v623 = vld [vmem:[#allocation7 + $0x38] sm:$0xff]
    %v624 = vld [vmem:[#allocation7 + $0x40] sm:$0xff]
    %v625 = vld [vmem:[#allocation7 + $0x48] sm:$0xff]
    %v626 = vld [vmem:[#allocation7 + $0x50] sm:$0xff]
    %v627 = vld [vmem:[#allocation7 + $0x58] sm:$0xff]
    %v628 = vld [vmem:[#allocation7 + $0x60] sm:$0xff]
    %v629 = vld [vmem:[#allocation7 + $0x68] sm:$0xff]
    %v630 = vld [vmem:[#allocation7 + $0x70] sm:$0xff]
    %v631 = vld [vmem:[#allocation7 + $0x78] sm:$0xff]
    %v632 = vld [vmem:[#allocation7 + $0x80] sm:$0xff]
    %v633 = vld [vmem:[#allocation7 + $0x88] sm:$0xff]
    %v634 = vld [vmem:[#allocation7 + $0x90] sm:$0xff]
    %v635 = vld [vmem:[#allocation7 + $0x98] sm:$0xff]
    %v636 = vld [vmem:[#allocation7 + $0xa0] sm:$0xff]
    %v637 = vld [vmem:[#allocation7 + $0xa8] sm:$0xff]
    %v638 = vld [vmem:[#allocation7 + $0xb0] sm:$0xff]
    %v639 = vld [vmem:[#allocation7 + $0xb8] sm:$0xff]
    %v640 = vld [vmem:[#allocation7 + $0xc0] sm:$0xff]
    %v641 = vld [vmem:[#allocation7 + $0xc8] sm:$0xff]
    %v642 = vld [vmem:[#allocation7 + $0xd0] sm:$0xff]
    %v643 = vld [vmem:[#allocation7 + $0xd8] sm:$0xff]
    %v644 = vld [vmem:[#allocation7 + $0xe0] sm:$0xff]
    %v645 = vld [vmem:[#allocation7 + $0xe8] sm:$0xff]
    %v646 = vld [vmem:[#allocation7 + $0xf0] sm:$0xff]
    %v647 = vld [vmem:[#allocation7 + $0xf8] sm:$0xff]
    %v648 = vld [vmem:[#allocation7 + $0x100] sm:$0xff]
    %v649 = vld [vmem:[#allocation7 + $0x108] sm:$0xff]
    %v650 = vld [vmem:[#allocation7 + $0x110] sm:$0xff]
    %v651 = vld [vmem:[#allocation7 + $0x118] sm:$0xff]
    %v652 = vld [vmem:[#allocation7 + $0x120] sm:$0xff]
    %v653 = vld [vmem:[#allocation7 + $0x128] sm:$0xff]
    %v654 = vld [vmem:[#allocation7 + $0x130] sm:$0xff]
    %v655 = vld [vmem:[#allocation7 + $0x138] sm:$0xff]
    %v656 = vld [vmem:[#allocation7 + $0x140] sm:$0xff]
    %v657 = vld [vmem:[#allocation7 + $0x148] sm:$0xff]
    %v658 = vld [vmem:[#allocation7 + $0x150] sm:$0xff]
    %v659 = vld [vmem:[#allocation7 + $0x158] sm:$0xff]
    %v660 = vld [vmem:[#allocation7 + $0x160] sm:$0xff]
    %v661 = vld [vmem:[#allocation7 + $0x168] sm:$0xff]
    %v662 = vld [vmem:[#allocation7 + $0x170] sm:$0xff]
    %v663 = vld [vmem:[#allocation7 + $0x178] sm:$0xff]
    %v664 = vld [vmem:[#allocation7 + $0x180] sm:$0xff]
    %v665 = vld [vmem:[#allocation7 + $0x188] sm:$0xff]
    %v666 = vld [vmem:[#allocation7 + $0x190] sm:$0xff]
    %v667 = vld [vmem:[#allocation7 + $0x198] sm:$0xff]
    %v668 = vld [vmem:[#allocation7 + $0x1a0] sm:$0xff]
    %v669 = vld [vmem:[#allocation7 + $0x1a8] sm:$0xff]
    %v670 = vld [vmem:[#allocation7 + $0x1b0] sm:$0xff]
    %v671 = vld [vmem:[#allocation7 + $0x1b8] sm:$0xff]
    %v672 = vld [vmem:[#allocation7 + $0x1c0] sm:$0xff]
    %v673 = vld [vmem:[#allocation7 + $0x1c8] sm:$0xff]
    %v674 = vld [vmem:[#allocation7 + $0x1d0] sm:$0xff]
    %v675 = vld [vmem:[#allocation7 + $0x1d8] sm:$0xff]
    %v676 = vld [vmem:[#allocation7 + $0x1e0] sm:$0xff]
    %v677 = vld [vmem:[#allocation7 + $0x1e8] sm:$0xff]
    %v678 = vld [vmem:[#allocation7 + $0x1f0] sm:$0xff]
    %v679 = vld [vmem:[#allocation7 + $0x1f8] sm:$0xff]
    %v680 = vld [vmem:[%s4] sm:$0x3]
    %v682 = vlaneseq
    %v683 = vshrl.u32 %v682, 7
    %v684 = vsub.s32 0, %v683
    %v685 = vrot.slane %v680, %v684
    %v686 = vlaneseq
    %v687 = vshrl.u32 %v686, 7
    %v688 = vsub.s32 1, %v687
    %v689 = vrot.slane %v680, %v688
    %v756 = vunpack.c.l.b16 %v616
    %v757 = vunpack.c.h.b16 %v616
    %v758 = vunpack.c.l.b16 %v617
    %v759 = vunpack.c.h.b16 %v617
    %v760 = vunpack.c.l.b16 %v618
    %v761 = vunpack.c.h.b16 %v618
    %v762 = vunpack.c.l.b16 %v619
    %v763 = vunpack.c.h.b16 %v619
    %v764 = vunpack.c.l.b16 %v620
    %v765 = vunpack.c.h.b16 %v620
    %v766 = vunpack.c.l.b16 %v621
    %v767 = vunpack.c.h.b16 %v621
    %v768 = vunpack.c.l.b16 %v622
    %v769 = vunpack.c.h.b16 %v622
    %v770 = vunpack.c.l.b16 %v623
    %v771 = vunpack.c.h.b16 %v623
    %v772 = vunpack.c.l.b16 %v624
    %v773 = vunpack.c.h.b16 %v624
    %v774 = vunpack.c.l.b16 %v625
    %v775 = vunpack.c.h.b16 %v625
    %v776 = vunpack.c.l.b16 %v626
    %v777 = vunpack.c.h.b16 %v626
    %v778 = vunpack.c.l.b16 %v627
    %v779 = vunpack.c.h.b16 %v627
    %v780 = vunpack.c.l.b16 %v628
    %v781 = vunpack.c.h.b16 %v628
    %v782 = vunpack.c.l.b16 %v629
    %v783 = vunpack.c.h.b16 %v629
    %v784 = vunpack.c.l.b16 %v630
    %v785 = vunpack.c.h.b16 %v630
    %v786 = vunpack.c.l.b16 %v631
    %v787 = vunpack.c.h.b16 %v631
    %v788 = vunpack.c.l.b16 %v632
    %v789 = vunpack.c.h.b16 %v632
    %v790 = vunpack.c.l.b16 %v633
    %v791 = vunpack.c.h.b16 %v633
    %v792 = vunpack.c.l.b16 %v634
    %v793 = vunpack.c.h.b16 %v634
    %v794 = vunpack.c.l.b16 %v635
    %v795 = vunpack.c.h.b16 %v635
    %v796 = vunpack.c.l.b16 %v636
    %v797 = vunpack.c.h.b16 %v636
    %v798 = vunpack.c.l.b16 %v637
    %v799 = vunpack.c.h.b16 %v637
    %v800 = vunpack.c.l.b16 %v638
    %v801 = vunpack.c.h.b16 %v638
    %v802 = vunpack.c.l.b16 %v639
    %v803 = vunpack.c.h.b16 %v639
    %v804 = vunpack.c.l.b16 %v640
    %v805 = vunpack.c.h.b16 %v640
    %v806 = vunpack.c.l.b16 %v641
    %v807 = vunpack.c.h.b16 %v641
    %v808 = vunpack.c.l.b16 %v642
    %v809 = vunpack.c.h.b16 %v642
    %v810 = vunpack.c.l.b16 %v643
    %v811 = vunpack.c.h.b16 %v643
    %v812 = vunpack.c.l.b16 %v644
    %v813 = vunpack.c.h.b16 %v644
    %v814 = vunpack.c.l.b16 %v645
    %v815 = vunpack.c.h.b16 %v645
    %v816 = vunpack.c.l.b16 %v646
    %v817 = vunpack.c.h.b16 %v646
    %v818 = vunpack.c.l.b16 %v647
    %v819 = vunpack.c.h.b16 %v647
    %v820 = vunpack.c.l.b16 %v648
    %v821 = vunpack.c.h.b16 %v648
    %v822 = vunpack.c.l.b16 %v649
    %v823 = vunpack.c.h.b16 %v649
    %v824 = vunpack.c.l.b16 %v650
    %v825 = vunpack.c.h.b16 %v650
    %v826 = vunpack.c.l.b16 %v651
    %v827 = vunpack.c.h.b16 %v651
    %v828 = vunpack.c.l.b16 %v652
    %v829 = vunpack.c.h.b16 %v652
    %v830 = vunpack.c.l.b16 %v653
    %v831 = vunpack.c.h.b16 %v653
    %v832 = vunpack.c.l.b16 %v654
    %v833 = vunpack.c.h.b16 %v654
    %v834 = vunpack.c.l.b16 %v655
    %v835 = vunpack.c.h.b16 %v655
    %v836 = vunpack.c.l.b16 %v656
    %v837 = vunpack.c.h.b16 %v656
    %v838 = vunpack.c.l.b16 %v657
    %v839 = vunpack.c.h.b16 %v657
    %v840 = vunpack.c.l.b16 %v658
    %v841 = vunpack.c.h.b16 %v658
    %v842 = vunpack.c.l.b16 %v659
    %v843 = vunpack.c.h.b16 %v659
    %v844 = vunpack.c.l.b16 %v660
    %v845 = vunpack.c.h.b16 %v660
    %v846 = vunpack.c.l.b16 %v661
    %v847 = vunpack.c.h.b16 %v661
    %v848 = vunpack.c.l.b16 %v662
    %v849 = vunpack.c.h.b16 %v662
    %v850 = vunpack.c.l.b16 %v663
    %v851 = vunpack.c.h.b16 %v663
    %v852 = vunpack.c.l.b16 %v664
    %v853 = vunpack.c.h.b16 %v664
    %v854 = vunpack.c.l.b16 %v665
    %v855 = vunpack.c.h.b16 %v665
    %v856 = vunpack.c.l.b16 %v666
    %v857 = vunpack.c.h.b16 %v666
    %v858 = vunpack.c.l.b16 %v667
    %v859 = vunpack.c.h.b16 %v667
    %v860 = vunpack.c.l.b16 %v668
    %v861 = vunpack.c.h.b16 %v668
    %v862 = vunpack.c.l.b16 %v669
    %v863 = vunpack.c.h.b16 %v669
    %v864 = vunpack.c.l.b16 %v670
    %v865 = vunpack.c.h.b16 %v670
    %v866 = vunpack.c.l.b16 %v671
    %v867 = vunpack.c.h.b16 %v671
    %v868 = vunpack.c.l.b16 %v672
    %v869 = vunpack.c.h.b16 %v672
    %v870 = vunpack.c.l.b16 %v673
    %v871 = vunpack.c.h.b16 %v673
    %v872 = vunpack.c.l.b16 %v674
    %v873 = vunpack.c.h.b16 %v674
    %v874 = vunpack.c.l.b16 %v675
    %v875 = vunpack.c.h.b16 %v675
    %v876 = vunpack.c.l.b16 %v676
    %v877 = vunpack.c.h.b16 %v676
    %v878 = vunpack.c.l.b16 %v677
    %v879 = vunpack.c.h.b16 %v677
    %v880 = vunpack.c.l.b16 %v678
    %v881 = vunpack.c.h.b16 %v678
    %v882 = vunpack.c.l.b16 %v679
    %v883 = vunpack.c.h.b16 %v679
    %v884 = vpack.c.b16 %v758, %v756
    %v885 = vpack.c.b16 %v759, %v757
    %v886 = vpack.c.b16 %v762, %v760
    %v887 = vpack.c.b16 %v763, %v761
    %v888 = vpack.c.b16 %v766, %v764
    %v889 = vpack.c.b16 %v767, %v765
    %v890 = vpack.c.b16 %v770, %v768
    %v891 = vpack.c.b16 %v771, %v769
    %v892 = vpack.c.b16 %v774, %v772
    %v893 = vpack.c.b16 %v775, %v773
    %v894 = vpack.c.b16 %v778, %v776
    %v895 = vpack.c.b16 %v779, %v777
    %v896 = vpack.c.b16 %v782, %v780
    %v897 = vpack.c.b16 %v783, %v781
    %v898 = vpack.c.b16 %v786, %v784
    %v899 = vpack.c.b16 %v787, %v785
    %v900 = vpack.c.b16 %v790, %v788
    %v901 = vpack.c.b16 %v791, %v789
    %v902 = vpack.c.b16 %v794, %v792
    %v903 = vpack.c.b16 %v795, %v793
    %v904 = vpack.c.b16 %v798, %v796
    %v905 = vpack.c.b16 %v799, %v797
    %v906 = vpack.c.b16 %v802, %v800
    %v907 = vpack.c.b16 %v803, %v801
    %v908 = vpack.c.b16 %v806, %v804
    %v909 = vpack.c.b16 %v807, %v805
    %v910 = vpack.c.b16 %v810, %v808
    %v911 = vpack.c.b16 %v811, %v809
    %v912 = vpack.c.b16 %v814, %v812
    %v913 = vpack.c.b16 %v815, %v813
    %v914 = vpack.c.b16 %v818, %v816
    %v915 = vpack.c.b16 %v819, %v817
    %v916 = vpack.c.b16 %v822, %v820
    %v917 = vpack.c.b16 %v823, %v821
    %v918 = vpack.c.b16 %v826, %v824
    %v919 = vpack.c.b16 %v827, %v825
    %v920 = vpack.c.b16 %v830, %v828
    %v921 = vpack.c.b16 %v831, %v829
    %v922 = vpack.c.b16 %v834, %v832
    %v923 = vpack.c.b16 %v835, %v833
    %v924 = vpack.c.b16 %v838, %v836
    %v925 = vpack.c.b16 %v839, %v837
    %v926 = vpack.c.b16 %v842, %v840
    %v927 = vpack.c.b16 %v843, %v841
    %v928 = vpack.c.b16 %v846, %v844
    %v929 = vpack.c.b16 %v847, %v845
    %v930 = vpack.c.b16 %v850, %v848
    %v931 = vpack.c.b16 %v851, %v849
    %v932 = vpack.c.b16 %v854, %v852
    %v933 = vpack.c.b16 %v855, %v853
    %v934 = vpack.c.b16 %v858, %v856
    %v935 = vpack.c.b16 %v859, %v857
    %v936 = vpack.c.b16 %v862, %v860
    %v937 = vpack.c.b16 %v863, %v861
    %v938 = vpack.c.b16 %v866, %v864
    %v939 = vpack.c.b16 %v867, %v865
    %v940 = vpack.c.b16 %v870, %v868
    %v941 = vpack.c.b16 %v871, %v869
    %v942 = vpack.c.b16 %v874, %v872
    %v943 = vpack.c.b16 %v875, %v873
    %v944 = vpack.c.b16 %v878, %v876
    %v945 = vpack.c.b16 %v879, %v877
    %v946 = vpack.c.b16 %v882, %v880
    %v947 = vpack.c.b16 %v883, %v881
    %1012 = vmatprep.subr.bf16.mxu0 %v885
    %1013 = vmatpush1.bf16.msra.mxu0 %v884
    %1014 = vmatprep.subr.bf16.mxu0 %v887
    %1015 = vmatpush1.bf16.msra.mxu0 %v886
    %1016 = vmatprep.subr.bf16.mxu0 %v889
    %1017 = vmatpush1.bf16.msra.mxu0 %v888
    %1018 = vmatprep.subr.bf16.mxu0 %v891
    %1019 = vmatpush1.bf16.msra.mxu0 %v890
    %1020 = vmatprep.subr.bf16.mxu0 %v893
    %1021 = vmatpush1.bf16.msra.mxu0 %v892
    %1022 = vmatprep.subr.bf16.mxu0 %v895
    %1023 = vmatpush1.bf16.msra.mxu0 %v894
    %1024 = vmatprep.subr.bf16.mxu0 %v897
    %1025 = vmatpush1.bf16.msra.mxu0 %v896
    %1026 = vmatprep.subr.bf16.mxu0 %v899
    %1027 = vmatpush1.bf16.msra.mxu0 %v898
    %1028 = vmatprep.subr.bf16.mxu0 %v901
    %1029 = vmatpush1.bf16.msra.mxu0 %v900
    %1030 = vmatprep.subr.bf16.mxu0 %v903
    %1031 = vmatpush1.bf16.msra.mxu0 %v902
    %1032 = vmatprep.subr.bf16.mxu0 %v905
    %1033 = vmatpush1.bf16.msra.mxu0 %v904
    %1034 = vmatprep.subr.bf16.mxu0 %v907
    %1035 = vmatpush1.bf16.msra.mxu0 %v906
    %1036 = vmatprep.subr.bf16.mxu0 %v909
    %1037 = vmatpush1.bf16.msra.mxu0 %v908
    %1038 = vmatprep.subr.bf16.mxu0 %v911
    %1039 = vmatpush1.bf16.msra.mxu0 %v910
    %1040 = vmatprep.subr.bf16.mxu0 %v913
    %1041 = vmatpush1.bf16.msra.mxu0 %v912
    %1042 = vmatprep.subr.bf16.mxu0 %v915
    %1043 = vmatpush1.bf16.msra.mxu0 %v914
    %1044 = vmatprep.mubr.bf16.mxu0 %v609
    %1045 = vmatmul.mubr.bf16.gmra.mrb[0].mxu0 %v608
    %v1046 = vpop.f32.mrb[0].mxu0
    %v1047 = vadd.f32 %v685, %v1046
    %v1048 = vpop.f32.mrb[0].mxu0
    %v1049 = vadd.f32 %v689, %v1048
    %v1050 = vpop.f32.mrb[0].mxu0
    %v1051 = vadd.f32 %v685, %v1050
    %v1052 = vpop.f32.mrb[0].mxu0
    %v1053 = vadd.f32 %v689, %v1052
    %1054 = vmatprep.mubr.bf16.mxu0 %v613
    %1055 = vmatmul.mubr.bf16.gmra.mrb[0].mxu0 %v612
    %v1056 = vpop.f32.mrb[0].mxu0
    %v1057 = vadd.f32 %v685, %v1056
    %v1058 = vpop.f32.mrb[0].mxu0
    %v1059 = vadd.f32 %v689, %v1058
    %v1060 = vpop.f32.mrb[0].mxu0
    %v1061 = vadd.f32 %v685, %v1060
    %v1062 = vpop.f32.mrb[0].mxu0
    %v1063 = vadd.f32 %v689, %v1062
    %1064 = vdwg.mxu0
    %1065 = vmatprep.subr.bf16.mxu0 %v917
    %1066 = vmatpush1.bf16.msra.mxu0 %v916
    %1067 = vmatprep.subr.bf16.mxu0 %v919
    %1068 = vmatpush1.bf16.msra.mxu0 %v918
    %1069 = vmatprep.subr.bf16.mxu0 %v921
    %1070 = vmatpush1.bf16.msra.mxu0 %v920
    %1071 = vmatprep.subr.bf16.mxu0 %v923
    %1072 = vmatpush1.bf16.msra.mxu0 %v922
    %1073 = vmatprep.subr.bf16.mxu0 %v925
    %1074 = vmatpush1.bf16.msra.mxu0 %v924
    %1075 = vmatprep.subr.bf16.mxu0 %v927
    %1076 = vmatpush1.bf16.msra.mxu0 %v926
    %1077 = vmatprep.subr.bf16.mxu0 %v929
    %1078 = vmatpush1.bf16.msra.mxu0 %v928
    %1079 = vmatprep.subr.bf16.mxu0 %v931
    %1080 = vmatpush1.bf16.msra.mxu0 %v930
    %1081 = vmatprep.subr.bf16.mxu0 %v933
    %1082 = vmatpush1.bf16.msra.mxu0 %v932
    %1083 = vmatprep.subr.bf16.mxu0 %v935
    %1084 = vmatpush1.bf16.msra.mxu0 %v934
    %1085 = vmatprep.subr.bf16.mxu0 %v937
    %1086 = vmatpush1.bf16.msra.mxu0 %v936
    %1087 = vmatprep.subr.bf16.mxu0 %v939
    %1088 = vmatpush1.bf16.msra.mxu0 %v938
    %1089 = vmatprep.subr.bf16.mxu0 %v941
    %1090 = vmatpush1.bf16.msra.mxu0 %v940
    %1091 = vmatprep.subr.bf16.mxu0 %v943
    %1092 = vmatpush1.bf16.msra.mxu0 %v942
    %1093 = vmatprep.subr.bf16.mxu0 %v945
    %1094 = vmatpush1.bf16.msra.mxu0 %v944
    %1095 = vmatprep.subr.bf16.mxu0 %v947
    %1096 = vmatpush1.bf16.msra.mxu0 %v946
    %1097 = vmatprep.mubr.bf16.mxu0 %v611
    %1098 = vmatmul.mubr.bf16.gmra.mrb[0].mxu0 %v610
    %v1099 = vpop.f32.mrb[0].mxu0
    %v1100 = vadd.f32 %v1047, %v1099
    %v1101 = vpop.f32.mrb[0].mxu0
    %v1102 = vadd.f32 %v1049, %v1101
    %v1103 = vpop.f32.mrb[0].mxu0
    %v1104 = vadd.f32 %v1051, %v1103
    %v1105 = vpop.f32.mrb[0].mxu0
    %v1106 = vadd.f32 %v1053, %v1105
    %1107 = vmatprep.mubr.bf16.mxu0 %v615
    %1108 = vmatmul.mubr.bf16.gmra.mrb[0].mxu0 %v614
    %v1109 = vpop.f32.mrb[0].mxu0
    %v1110 = vadd.f32 %v1057, %v1109
    %v1111 = vpop.f32.mrb[0].mxu0
    %v1112 = vadd.f32 %v1059, %v1111
    %v1113 = vpop.f32.mrb[0].mxu0
    %v1114 = vadd.f32 %v1061, %v1113
    %v1115 = vpop.f32.mrb[0].mxu0
    %v1116 = vadd.f32 %v1063, %v1115
    %1117 = vdwg.mxu0
    %v1118 = vadd.f32 %v1100, %v68
    %v1119 = vadd.f32 %v1102, %v69
    %v1120 = vadd.f32 %v1104, %v70
    %v1121 = vadd.f32 %v1106, %v71
    %v1122 = vadd.f32 %v1110, %v72
    %v1123 = vadd.f32 %v1112, %v73
    %v1124 = vadd.f32 %v1114, %v74
    %v1125 = vadd.f32 %v1116, %v75
    %v1126 = vadd.f32 %v1118, %v1119
    %1127 = vadd.xlane.f32.xlu0 %v1126
    %v1128 = vpop.xlane.xlu0 %1127
    %v1129 = vadd.f32 %v1120, %v1121
    %1130 = vadd.xlane.f32.xlu0 %v1129
    %v1131 = vpop.xlane.xlu0 %1130
    %v1132 = vadd.f32 %v1122, %v1123
    %1133 = vadd.xlane.f32.xlu0 %v1132
    %v1134 = vpop.xlane.xlu0 %1133
    %v1135 = vadd.f32 %v1124, %v1125
    %1136 = vadd.xlane.f32.xlu0 %v1135
    %v1137 = vpop.xlane.xlu0 %1136
    %v1138 = vmul.f32 %v1128, 0.00390625
    %v1139 = vmul.f32 %v1131, 0.00390625
    %v1140 = vmul.f32 %v1134, 0.00390625
    %v1141 = vmul.f32 %v1137, 0.00390625
    %v1142 = vsub.f32 %v1118, %v1138
    %v1143 = vsub.f32 %v1119, %v1138
    %v1144 = vsub.f32 %v1120, %v1139
    %v1145 = vsub.f32 %v1121, %v1139
    %v1146 = vsub.f32 %v1122, %v1140
    %v1147 = vsub.f32 %v1123, %v1140
    %v1148 = vsub.f32 %v1124, %v1141
    %v1149 = vsub.f32 %v1125, %v1141
    %v1150 = vmul.f32 %v1142, %v1142
    %v1151 = vmul.f32 %v1143, %v1143
    %v1152 = vmul.f32 %v1144, %v1144
    %v1153 = vmul.f32 %v1145, %v1145
    %v1154 = vmul.f32 %v1146, %v1146
    %v1155 = vmul.f32 %v1147, %v1147
    %v1156 = vmul.f32 %v1148, %v1148
    %v1157 = vmul.f32 %v1149, %v1149
    %v1158 = vadd.f32 %v1150, %v1151
    %1159 = vadd.xlane.f32.xlu0 %v1158
    %v1160 = vpop.xlane.xlu0 %1159
    %v1161 = vadd.f32 %v1152, %v1153
    %1162 = vadd.xlane.f32.xlu0 %v1161
    %v1163 = vpop.xlane.xlu0 %1162
    %v1164 = vadd.f32 %v1154, %v1155
    %1165 = vadd.xlane.f32.xlu0 %v1164
    %v1166 = vpop.xlane.xlu0 %1165
    %v1167 = vadd.f32 %v1156, %v1157
    %1168 = vadd.xlane.f32.xlu0 %v1167
    %v1169 = vpop.xlane.xlu0 %1168
    %v1170 = vmul.f32 %v1160, 0.00390625
    %v1171 = vmul.f32 %v1163, 0.00390625
    %v1172 = vmul.f32 %v1166, 0.00390625
    %v1173 = vmul.f32 %v1169, 0.00390625
    %v1174 = vadd.f32 %v1170, 1e-05
    %v1175 = vadd.f32 %v1171, 1e-05
    %v1176 = vadd.f32 %v1172, 1e-05
    %v1177 = vadd.f32 %v1173, 1e-05
    %v1178 = vrsqrt.pop %v1174
    %v1179 = vrsqrt.pop %v1175
    %v1180 = vrsqrt.pop %v1176
    %v1181 = vrsqrt.pop %v1177
    %v1182 = vmul.f32 %v1142, %v1178
    %v1183 = vmul.f32 %v1143, %v1178
    %v1184 = vmul.f32 %v1144, %v1179
    %v1185 = vmul.f32 %v1145, %v1179
    %v1186 = vmul.f32 %v1146, %v1180
    %v1187 = vmul.f32 %v1147, %v1180
    %v1188 = vmul.f32 %v1148, %v1181
    %v1189 = vmul.f32 %v1149, %v1181
    %v1190 = vld [vmem:[%s5] sm:$0x3]
    %v1192 = vlaneseq
    %v1193 = vshrl.u32 %v1192, 7
    %v1194 = vsub.s32 0, %v1193
    %v1195 = vrot.slane %v1190, %v1194
    %v1196 = vlaneseq
    %v1197 = vshrl.u32 %v1196, 7
    %v1198 = vsub.s32 1, %v1197
    %v1199 = vrot.slane %v1190, %v1198
    %v1202 = vmul.f32 %v1182, %v1195
    %v1203 = vmul.f32 %v1183, %v1199
    %v1204 = vmul.f32 %v1184, %v1195
    %v1205 = vmul.f32 %v1185, %v1199
    %v1206 = vmul.f32 %v1186, %v1195
    %v1207 = vmul.f32 %v1187, %v1199
    %v1208 = vmul.f32 %v1188, %v1195
    %v1209 = vmul.f32 %v1189, %v1199
    %v1210 = vld [vmem:[%s6] sm:$0x3]
    %v1212 = vlaneseq
    %v1213 = vshrl.u32 %v1212, 7
    %v1214 = vsub.s32 0, %v1213
    %v1215 = vrot.slane %v1210, %v1214
    %v1216 = vlaneseq
    %v1217 = vshrl.u32 %v1216, 7
    %v1218 = vsub.s32 1, %v1217
    %v1219 = vrot.slane %v1210, %v1218
    %v1222 = vadd.f32 %v1202, %v1215
    %v1223 = vadd.f32 %v1203, %v1219
    %v1224 = vadd.f32 %v1204, %v1215
    %v1225 = vadd.f32 %v1205, %v1219
    %v1226 = vadd.f32 %v1206, %v1215
    %v1227 = vadd.f32 %v1207, %v1219
    %v1228 = vadd.f32 %v1208, %v1215
    %v1229 = vadd.f32 %v1209, %v1219
    %1230 = vst [vmem:[#allocation8] sm:$0xff] %v1222
    %1231 = vst [vmem:[#allocation8 + $0x8] sm:$0xff] %v1223
    %1232 = vst [vmem:[#allocation8 + $0x10] sm:$0xff] %v1224
    %1233 = vst [vmem:[#allocation8 + $0x18] sm:$0xff] %v1225
    %1234 = vst [vmem:[#allocation8 + $0x20] sm:$0xff] %v1226
    %1235 = vst [vmem:[#allocation8 + $0x28] sm:$0xff] %v1227
    %1236 = vst [vmem:[#allocation8 + $0x30] sm:$0xff] %v1228
    %1237 = vst [vmem:[#allocation8 + $0x38] sm:$0xff] %v1229
    // Predicated region
    $region42: #{tpu_custom_call.1} parent=1 // pred_check
      _
    $region43: #{tpu_custom_call.1} parent=1 // pred_check_branch
      %1239 = sbr.rel (0) target = $region45
    $region44: #{tpu_custom_call.1} parent=1 // pred_region
      %s1241 = ssub.s32 1024, 1024
      %1242 = vsyncadd [#allocation4], %s1241
      %s1243 = sshll.u32 [#allocation8], 4
      %s1244 = int_to_ptr.vmem [resolvable:$true] %s1243
      %1249 = dma.vmem_to_hbm [thread:$0]  %s1244, 1024, %s7, [#allocation4], 256, 256, 16
    $region45: #{tpu_custom_call.1} parent=1 // pred_fallthru
      _
    // Predicated region
    $region46: #{tpu_custom_call.1} parent=1 // pred_check
      _
    $region47: #{tpu_custom_call.1} parent=1 // pred_check_branch
      %1251 = sbr.rel (0) target = $region49
    $region48: #{tpu_custom_call.1} parent=1 // pred_region
      %1252 = dma.done [#allocation4], 1024
    $region49: #{tpu_custom_call.1} parent=1 // pred_fallthru
      _
    %1253 = vsyncpa [#allocation3], 1
    %1254 = vsyncpa [#allocation6], 1
    %1255 = vsyncpa [#allocation4], 1

</llo_original>
